<compile_context>
chip_gen: v6e
topology: v6e:2x2x1
jax: 0.10.0
libtpu: 0.0.40
codegen_flags: <defaults>
</compile_context>

<pallas_src>
import math
from functools import partial

import numpy as np
import jax
import jax.numpy as jnp
from jax.experimental import pallas as pl
from jax.experimental.pallas import tpu as pltpu


# ----------------------------------------------------------------------------
# sin-cos positional embeddings (numpy, identical semantics to the reference)
# ----------------------------------------------------------------------------
def get_1d_sincos_pos_embed_from_grid(embed_dim, pos):
    assert embed_dim % 2 == 0
    omega = np.arange(embed_dim // 2, dtype=np.float32)
    omega /= embed_dim / 2.0
    omega = 1.0 / 10000 ** omega
    pos = pos.reshape(-1)
    out = np.einsum('m,d->md', pos, omega)
    return np.concatenate([np.sin(out), np.cos(out)], axis=1)


def get_2d_sincos_pos_embed_from_grid(embed_dim, grid):
    assert embed_dim % 2 == 0
    emb_h = get_1d_sincos_pos_embed_from_grid(embed_dim // 2, grid[0])
    emb_w = get_1d_sincos_pos_embed_from_grid(embed_dim // 2, grid[1])
    return np.concatenate([emb_h, emb_w], axis=1)


def get_2d_sincos_pos_embed(embed_dim, grid_size, cls_token=False):
    grid_h = np.arange(grid_size, dtype=np.float32)
    grid_w = np.arange(grid_size, dtype=np.float32)
    grid = np.meshgrid(grid_w, grid_h)
    grid = np.stack(grid, axis=0).reshape([2, 1, grid_size, grid_size])
    pos_embed = get_2d_sincos_pos_embed_from_grid(embed_dim, grid)
    if cls_token:
        pos_embed = np.concatenate([np.zeros([1, embed_dim]), pos_embed], axis=0)
    return pos_embed


# ----------------------------------------------------------------------------
# small helpers
# ----------------------------------------------------------------------------
def _vmem_limit_bytes(block_bytes):
    """Scoped-VMEM budget from actual tile sizes (double-buffer + headroom)."""
    est = 2 * int(block_bytes) + (2 << 20)
    return int(min(64 << 20, max(8 << 20, est)))


_SINGLE_BUFFER_OK = None


def _probe_single_buffering():
    """One-time probe: is pipeline_mode=pl.Buffered(1) supported here?"""
    try:
        spec = pl.BlockSpec((8, 128), lambda i: (0, 0), pipeline_mode=pl.Buffered(1))

        def k(x_ref, o_ref):
            o_ref[...] = x_ref[...] + 1.0

        x = jnp.zeros((8, 128), jnp.float32)
        jax.block_until_ready(
            pl.pallas_call(k, out_shape=jax.ShapeDtypeStruct((8, 128), jnp.float32),
                           grid=(1,), in_specs=[spec],
                           out_specs=pl.BlockSpec((8, 128), lambda i: (0, 0)))(x))
        return True
    except Exception:
        return False


def _const_spec(block_shape, index_map):
    """BlockSpec for a constant-index (weight-like) input: single-buffered."""
    global _SINGLE_BUFFER_OK
    if _SINGLE_BUFFER_OK is None:
        _SINGLE_BUFFER_OK = _probe_single_buffering()
    if _SINGLE_BUFFER_OK:
        return pl.BlockSpec(block_shape, index_map, pipeline_mode=pl.Buffered(1))
    return pl.BlockSpec(block_shape, index_map)


def pad_tokens(x, multiple=8):
    """Pad the token axis to a multiple of 8 and build an additive key mask."""
    B, N, E = x.shape
    n_pad = (-N) % multiple
    if n_pad:
        x = jnp.pad(x, ((0, 0), (0, n_pad), (0, 0)))
    valid = jnp.arange(N + n_pad) < N
    key_mask = jnp.where(valid, 0.0, -1e30).astype(jnp.float32).reshape(1, N + n_pad)
    return x, key_mask


# ----------------------------------------------------------------------------
# stand-alone (row-tiled) linear, optional fused pre-LayerNorm / GELU
# ----------------------------------------------------------------------------
def _linear_kernel(x_ref, w_ref, b_ref, o_ref, *, act):
    y = jnp.dot(x_ref[...].astype(jnp.bfloat16), w_ref[...],
                preferred_element_type=jnp.float32) + b_ref[...]
    if act == "gelu":
        y = jax.nn.gelu(y, approximate=False)      # exact erf GELU (torch default)
    o_ref[...] = y


def _ln_linear_kernel(x_ref, g_ref, beta_ref, w_ref, b_ref, o_ref, *, act, eps):
    x = x_ref[...]
    mu = jnp.mean(x, axis=-1, keepdims=True)
    var = jnp.mean((x - mu) ** 2, axis=-1, keepdims=True)
    h = (x - mu) * jax.lax.rsqrt(var + eps) * g_ref[...] + beta_ref[...]
    y = jnp.dot(h.astype(jnp.bfloat16), w_ref[...],
                preferred_element_type=jnp.float32) + b_ref[...]
    if act == "gelu":
        y = jax.nn.gelu(y, approximate=False)
    o_ref[...] = y


def linear(x, w, b, act=None, ln=None, eps=1e-5, tile_rows=512):
    """x: (..., K) @ w: (K, M) + b, row-tiled over the flattened batch dim.

    Weights are full-array, single-buffered (constant index_map) and cast to
    bf16 for the MXU; LN / GELU stay in f32.
    """
    lead = x.shape[:-1]
    K = x.shape[-1]
    M = w.shape[1]
    x2 = x.reshape(-1, K)
    R = x2.shape[0]
    if R <= tile_rows:
        TM, R_pad = R, R
    else:
        TM = tile_rows
        R_pad = ((R + TM - 1) // TM) * TM
    if R_pad != R:
        x2 = jnp.pad(x2, ((0, R_pad - R), (0, 0)))
    grid = (R_pad // TM,)

    xspec = pl.BlockSpec((TM, K), lambda i: (i, 0))
    ospec = pl.BlockSpec((TM, M), lambda i: (i, 0))
    wspec = _const_spec((K, M), lambda i: (0, 0))
    bspec = _const_spec((1, M), lambda i: (0, 0))

    w_bf = w.astype(jnp.bfloat16)
    block_bytes = TM * K * 4 + K * M * 2 + M * 4 + TM * M * 4
    if ln is None:
        kernel = partial(_linear_kernel, act=act)
        args = (x2, w_bf, b.reshape(1, M))
        in_specs = [xspec, wspec, bspec]
    else:
        g, beta = ln
        kernel = partial(_ln_linear_kernel, act=act, eps=eps)
        args = (x2, g.reshape(1, K), beta.reshape(1, K), w_bf, b.reshape(1, M))
        gspec = _const_spec((1, K), lambda i: (0, 0))
        in_specs = [xspec, gspec, gspec, wspec, bspec]
        block_bytes += 2 * K * 4

    out = pl.pallas_call(
        kernel,
        out_shape=jax.ShapeDtypeStruct((R_pad, M), jnp.float32),
        grid=grid,
        in_specs=in_specs,
        out_specs=ospec,
        compiler_params=pltpu.CompilerParams(
            dimension_semantics=("parallel",),
            vmem_limit_bytes=_vmem_limit_bytes(block_bytes)),
    )(*args)
    if R_pad != R:
        out = out[:R]
    return out.reshape(*lead, M)


# ----------------------------------------------------------------------------
# fused transformer stack: ONE pallas_call, grid = (batch, layer)
# ----------------------------------------------------------------------------
def _blocks_kernel(x_ref, km_ref, ln1g_ref, ln1b_ref, qkvw_ref, qkvb_ref,
                   projw_ref, projb_ref, ln2g_ref, ln2b_ref,
                   fc1w_ref, fc1b_ref, fc2w_ref, fc2b_ref,
                   o_ref, xs_ref, attn_ref, *, num_heads, eps):
    """Pre-norm transformer block; the layer grid axis streams weights while
    the token state is carried in the VMEM scratch `xs_ref`."""
    layer = pl.program_id(1)

    @pl.when(layer == 0)
    def _():
        xs_ref[...] = x_ref[0]

    x = xs_ref[...]                               # (N, E) f32 carry
    E = x.shape[-1]
    Dh = E // num_heads
    scale = Dh ** -0.5
    km = km_ref[...]                              # (1, N) additive key mask

    # ---- LN1 (f32) ----
    mu = jnp.mean(x, axis=-1, keepdims=True)
    var = jnp.mean((x - mu) ** 2, axis=-1, keepdims=True)
    h = (x - mu) * jax.lax.rsqrt(var + eps) * ln1g_ref[0] + ln1b_ref[0]

    # ---- fused QKV projection (bf16 MXU, f32 accumulate) ----
    qkv = jnp.dot(h.astype(jnp.bfloat16), qkvw_ref[0],
                  preferred_element_type=jnp.float32) + qkvb_ref[0]   # (N, 3E)

    # ---- per-head attention; head outputs slice-stored into VMEM scratch ----
    for hd in range(num_heads):
        lo = hd * Dh
        q = (qkv[:, lo:lo + Dh] * scale).astype(jnp.bfloat16)
        k = qkv[:, E + lo:E + lo + Dh].astype(jnp.bfloat16)
        v = qkv[:, 2 * E + lo:2 * E + lo + Dh].astype(jnp.bfloat16)
        s = jax.lax.dot_general(q, k, (((1,), (1,)), ((), ())),
                                preferred_element_type=jnp.float32)   # (N, N)
        s = s + km                                  # mask padded keys
        s = s - jnp.max(s, axis=-1, keepdims=True)
        p = jnp.exp(s)
        p = p / jnp.sum(p, axis=-1, keepdims=True)  # exact softmax denominator
        attn_ref[:, lo:lo + Dh] = jnp.dot(p.astype(jnp.bfloat16), v,
                                          preferred_element_type=jnp.float32)

    # ---- output projection + residual ----
    x = x + jnp.dot(attn_ref[...].astype(jnp.bfloat16), projw_ref[0],
                    preferred_element_type=jnp.float32) + projb_ref[0]

    # ---- LN2 + MLP (exact GELU) + residual ----
    mu2 = jnp.mean(x, axis=-1, keepdims=True)
    var2 = jnp.mean((x - mu2) ** 2, axis=-1, keepdims=True)
    h2 = (x - mu2) * jax.lax.rsqrt(var2 + eps) * ln2g_ref[0] + ln2b_ref[0]
    h2 = jnp.dot(h2.astype(jnp.bfloat16), fc1w_ref[0],
                 preferred_element_type=jnp.float32) + fc1b_ref[0]
    h2 = jax.nn.gelu(h2, approximate=False)
    h2 = jnp.dot(h2.astype(jnp.bfloat16), fc2w_ref[0],
                 preferred_element_type=jnp.float32) + fc2b_ref[0]
    x = x + h2

    xs_ref[...] = x

    @pl.when(layer == pl.num_programs(1) - 1)
    def _():
        o_ref[0] = x


def blocks_forward(x, sp, num_heads, key_mask, eps=1e-5):
    """All layers of one transformer stack in a single pallas_call.

    x        : (B, N, E) with N a multiple of 8 (padded tokens).
    sp       : dict of layer-stacked block parameters (leading dim = depth).
    key_mask : (1, N) additive mask (0 valid / -1e30 padded).
    """
    B, N, E = x.shape
    depth = sp["qkv_w"].shape[0]
    hidden = sp["fc1_w"].shape[-1]

    def wmap(b, l):          # weight blocks: indexed by layer only
        return (l, 0, 0)

    def wspec(r, c):
        return pl.BlockSpec((1, r, c), wmap)

    in_specs = [
        pl.BlockSpec((1, N, E), lambda b, l: (b, 0, 0)),       # x (read at layer 0)
        _const_spec((1, N), lambda b, l: (0, 0)),              # key mask
        wspec(1, E), wspec(1, E),                              # ln1 gamma/beta
        wspec(E, 3 * E), wspec(1, 3 * E),                      # qkv w/b
        wspec(E, E), wspec(1, E),                              # proj w/b
        wspec(1, E), wspec(1, E),                              # ln2 gamma/beta
        wspec(E, hidden), wspec(1, hidden),                    # fc1 w/b
        wspec(hidden, E), wspec(1, E),                         # fc2 w/b
    ]

    # scoped-VMEM budget from actual per-step tile sizes
    w_bytes = 2 * (3 * E * E + E * E + 2 * E * hidden)                  # bf16 weights
    misc_bytes = 4 * (2 * 3 * E + 8 * E + 2 * hidden + N)               # biases/ln/mask
    act_bytes = 4 * (4 * N * E + N * N)                                 # x/out/scratch/scores
    vmem_limit = _vmem_limit_bytes(w_bytes + misc_bytes + act_bytes)

    return pl.pallas_call(
        partial(_blocks_kernel, num_heads=num_heads, eps=eps),
        out_shape=jax.ShapeDtypeStruct((B, N, E), jnp.float32),
        grid=(B, depth),
        in_specs=in_specs,
        out_specs=pl.BlockSpec((1, N, E), lambda b, l: (b, 0, 0)),
        scratch_shapes=[pltpu.VMEM((N, E), jnp.float32),    # token-state carry
                        pltpu.VMEM((N, E), jnp.float32)],   # attention output
        compiler_params=pltpu.CompilerParams(
            dimension_semantics=("parallel", "arbitrary"),
            vmem_limit_bytes=vmem_limit),
    )(x, key_mask,
      sp["ln1_g"], sp["ln1_b"],
      sp["qkv_w"].astype(jnp.bfloat16), sp["qkv_b"],
      sp["proj_w"].astype(jnp.bfloat16), sp["proj_b"],
      sp["ln2_g"], sp["ln2_b"],
      sp["fc1_w"].astype(jnp.bfloat16), sp["fc1_b"],
      sp["fc2_w"].astype(jnp.bfloat16), sp["fc2_b"])


# ----------------------------------------------------------------------------
# masked MSE loss, tiled over batch (reduction axis MUST stay "arbitrary")
# ----------------------------------------------------------------------------
def _loss_kernel(pred_ref, tgt_ref, mask_ref, o_ref, num_ref, den_ref):
    b = pl.program_id(0)

    @pl.when(b == 0)
    def _():
        num_ref[...] = jnp.zeros_like(num_ref)
        den_ref[...] = jnp.zeros_like(den_ref)

    diff = pred_ref[0] - tgt_ref[0]                            # (L, D)
    per_patch = jnp.mean(diff * diff, axis=-1, keepdims=True)  # (L, 1)
    m = mask_ref[0]                                            # (1, L) lane-dense
    num_ref[...] += jnp.dot(m, per_patch, preferred_element_type=jnp.float32)
    den_ref[...] += jnp.sum(m, keepdims=True)

    @pl.when(b == pl.num_programs(0) - 1)
    def _():
        o_ref[...] = num_ref[...] / den_ref[...]


def masked_mse_loss(pred, target, mask):
    B, L, D = pred.shape
    mask3 = mask.reshape(B, 1, L)                  # L on the lane axis
    out = pl.pallas_call(
        _loss_kernel,
        out_shape=jax.ShapeDtypeStruct((1, 1), jnp.float32),
        grid=(B,),
        in_specs=[
            pl.BlockSpec((1, L, D), lambda i: (i, 0, 0)),
            pl.BlockSpec((1, L, D), lambda i: (i, 0, 0)),
            pl.BlockSpec((1, 1, L), lambda i: (i, 0, 0)),
        ],
        out_specs=pl.BlockSpec((1, 1), lambda i: (0, 0)),
        scratch_shapes=[pltpu.VMEM((1, 1), jnp.float32),
                        pltpu.VMEM((1, 1), jnp.float32)],
        compiler_params=pltpu.CompilerParams(
            dimension_semantics=("arbitrary",)),   # accumulators: never "parallel"
    )(pred, target, mask3)
    return out[0, 0]


# ----------------------------------------------------------------------------
# model glue (reshapes, gathers, parameter setup) in plain JAX
# ----------------------------------------------------------------------------
def extract_patches_conv_order(imgs, p):
    """Conv2d(stride=p) equivalent patch extraction; flatten order (c, ph, pw)."""
    B, C, H, W = imgs.shape
    h, w = H // p, W // p
    x = imgs.reshape(B, C, h, p, w, p)
    x = jnp.transpose(x, (0, 2, 4, 1, 3, 5))
    return x.reshape(B, h * w, C * p * p)


def patchify_target(imgs, p):
    """Module `patchify`; flatten order (ph, pw, c)."""
    B, C, H, W = imgs.shape
    h, w = H // p, W // p
    x = imgs.reshape(B, C, h, p, w, p)
    x = jnp.transpose(x, (0, 2, 4, 3, 5, 1))
    return x.reshape(B, h * w, p * p * C)


def _xavier(key, fan_in, fan_out):
    a = math.sqrt(6.0 / (fan_in + fan_out))
    return jax.random.uniform(key, (fan_in, fan_out), jnp.float32, -a, a)


def init_block(keys, dim, mlp_ratio):
    hidden = int(dim * mlp_ratio)
    return dict(
        ln1_g=jnp.ones((dim,), jnp.float32), ln1_b=jnp.zeros((dim,), jnp.float32),
        qkv_w=_xavier(next(keys), dim, 3 * dim), qkv_b=jnp.zeros((3 * dim,), jnp.float32),
        proj_w=_xavier(next(keys), dim, dim), proj_b=jnp.zeros((dim,), jnp.float32),
        ln2_g=jnp.ones((dim,), jnp.float32), ln2_b=jnp.zeros((dim,), jnp.float32),
        fc1_w=_xavier(next(keys), dim, hidden), fc1_b=jnp.zeros((hidden,), jnp.float32),
        fc2_w=_xavier(next(keys), hidden, dim), fc2_b=jnp.zeros((dim,), jnp.float32),
    )


def _stack_blocks(blocks):
    """Stack per-block params along a leading layer axis for the layer grid."""
    def stk(name, row_vec=False):
        return jnp.stack([bp[name].reshape(1, -1) if row_vec else bp[name]
                          for bp in blocks], axis=0)
    return dict(
        ln1_g=stk("ln1_g", True), ln1_b=stk("ln1_b", True),
        qkv_w=stk("qkv_w"), qkv_b=stk("qkv_b", True),
        proj_w=stk("proj_w"), proj_b=stk("proj_b", True),
        ln2_g=stk("ln2_g", True), ln2_b=stk("ln2_b", True),
        fc1_w=stk("fc1_w"), fc1_b=stk("fc1_b", True),
        fc2_w=stk("fc2_w"), fc2_b=stk("fc2_b", True),
    )


def init_params(key, cfg):
    keys = iter(jax.random.split(key, 128))
    E, Ed = cfg["embed_dim"], cfg["dec_embed_dim"]
    p, C, L = cfg["patch_size"], cfg["in_chans"], cfg["num_patches"]
    patch_dim = C * p * p
    gs = int(L ** 0.5)
    params = {}
    params["pe_w"] = _xavier(next(keys), patch_dim, E)
    params["pe_b"] = jnp.zeros((E,), jnp.float32)
    params["ped_w"] = _xavier(next(keys), patch_dim, Ed)
    params["ped_b"] = jnp.zeros((Ed,), jnp.float32)
    params["cls_token"] = 0.02 * jax.random.normal(next(keys), (1, 1, E), jnp.float32)
    params["mask_token"] = 0.02 * jax.random.normal(next(keys), (1, 1, Ed), jnp.float32)
    params["pos_embed"] = jnp.asarray(
        get_2d_sincos_pos_embed(E, gs, cls_token=True), jnp.float32)[None]
    params["dec_pos_embed"] = jnp.asarray(
        get_2d_sincos_pos_embed(Ed, gs, cls_token=True), jnp.float32)[None]
    params["enc_blocks"] = _stack_blocks(
        [init_block(keys, E, cfg["mlp_ratio"]) for _ in range(cfg["depth"])])
    params["norm_g"] = jnp.ones((E,), jnp.float32)
    params["norm_b"] = jnp.zeros((E,), jnp.float32)
    params["dec_embed_w"] = _xavier(next(keys), E, Ed)
    params["dec_embed_b"] = jnp.zeros((Ed,), jnp.float32)
    params["dec_blocks"] = _stack_blocks(
        [init_block(keys, Ed, cfg["mlp_ratio"]) for _ in range(cfg["dec_depth"])])
    params["dec_norm_g"] = jnp.ones((Ed,), jnp.float32)
    params["dec_norm_b"] = jnp.zeros((Ed,), jnp.float32)
    params["dec_pred_w"] = _xavier(next(keys), Ed, patch_dim)
    params["dec_pred_b"] = jnp.zeros((patch_dim,), jnp.float32)
    return params


def mae_forward(params, imgs, mask_ratio, rng, cfg):
    B = imgs.shape[0]
    p, L = cfg["patch_size"], cfg["num_patches"]
    E, Ed = cfg["embed_dim"], cfg["dec_embed_dim"]
    key_mask_rng, key_sigma, key_noise = jax.random.split(rng, 3)

    # ---------------- encoder ----------------
    patches = extract_patches_conv_order(imgs, p)            # (B, L, C*p*p)
    x = linear(patches, params["pe_w"], params["pe_b"])      # PatchEmbed
    x = x + params["pos_embed"][:, 1:, :]

    # random masking (noise/argsort/gather kept as JAX glue)
    len_keep = int(L * (1 - mask_ratio))
    noise = jax.random.uniform(key_mask_rng, (B, L))
    ids_shuffle = jnp.argsort(noise, axis=1)
    ids_restore = jnp.argsort(ids_shuffle, axis=1)
    ids_keep = ids_shuffle[:, :len_keep]
    x = jnp.take_along_axis(x, ids_keep[:, :, None], axis=1)
    mask = jnp.ones((B, L), jnp.float32).at[:, :len_keep].set(0.0)
    mask = jnp.take_along_axis(mask, ids_restore, axis=1)

    cls = params["cls_token"] + params["pos_embed"][:, :1, :]
    cls = jnp.broadcast_to(cls, (B, 1, E))
    x = jnp.concatenate([cls, x], axis=1)
    n_enc = x.shape[1]
    x, enc_key_mask = pad_tokens(x)                          # pad N to multiple of 8
    x = blocks_forward(x, params["enc_blocks"], cfg["num_heads"], enc_key_mask)
    x = x[:, :n_enc, :]

    # ---------------- noise injection ----------------
    # TODO(synk): KarrasSampler class is not defined in the provided source;
    # a deterministic Karras-schedule add_noise equivalent is implemented here.
    smin, smax, rho, num_steps = 0.002, 80.0, 7.0, 40
    idx = jax.random.randint(key_sigma, (B,), 0, num_steps).astype(jnp.float32)
    t = idx / (num_steps - 1)
    sigma = (smax ** (1 / rho) + t * (smin ** (1 / rho) - smax ** (1 / rho))) ** rho
    eps = jax.random.normal(key_noise, imgs.shape, jnp.float32)
    noised_image = imgs + eps * sigma[:, None, None, None]

    # ---------------- decoder ----------------
    # final encoder LayerNorm fused into the decoder-embed linear
    x = linear(x, params["dec_embed_w"], params["dec_embed_b"],
               ln=(params["norm_g"], params["norm_b"]))
    n_mask = L + 1 - x.shape[1]
    mask_tokens = jnp.broadcast_to(params["mask_token"], (B, n_mask, Ed))
    x_ = jnp.concatenate([x[:, 1:, :], mask_tokens], axis=1)
    x_ = jnp.take_along_axis(
        x_, jnp.broadcast_to(ids_restore[:, :, None], (B, L, Ed)), axis=1)
    dec_patches = extract_patches_conv_order(noised_image, p)
    x_dec = linear(dec_patches, params["ped_w"], params["ped_b"])   # decoder PatchEmbed
    x_ = (1.0 - mask[:, :, None]) * x_ + mask[:, :, None] * x_dec
    x = jnp.concatenate([x[:, :1, :], x_], axis=1)
    x = x + params["dec_pos_embed"]
    n_dec = x.shape[1]
    x, dec_key_mask = pad_tokens(x)
    x = blocks_forward(x, params["dec_blocks"], cfg["dec_num_heads"], dec_key_mask)
    x = x[:, :n_dec, :]
    # final decoder LayerNorm fused into the prediction linear
    x = linear(x, params["dec_pred_w"], params["dec_pred_b"],
               ln=(params["dec_norm_g"], params["dec_norm_b"]))
    pred = x[:, 1:, :]

    # ---------------- loss (norm_pix_loss=False; weightings==1) ----------------
    target = patchify_target(imgs, p)
    loss = masked_mse_loss(pred, target, mask)
    return loss, pred, mask


if __name__ == "__main__":
    cfg = dict(
        img_size=16, patch_size=4, in_chans=3,
        embed_dim=32, depth=2, num_heads=2,
        dec_embed_dim=16, dec_depth=1, dec_num_heads=2,
        mlp_ratio=4.0,
    )
    cfg["num_patches"] = (cfg["img_size"] // cfg["patch_size"]) ** 2

    key = jax.random.PRNGKey(0)
    pkey, dkey, fkey = jax.random.split(key, 3)
    params = init_params(pkey, cfg)
    imgs = jax.random.normal(dkey, (2, cfg["in_chans"], cfg["img_size"], cfg["img_size"]),
                             jnp.float32)

    loss, pred, mask = mae_forward(params, imgs, 0.75, fkey, cfg)
    jax.block_until_ready((loss, pred, mask))
    assert pred.shape == (2, cfg["num_patches"], cfg["patch_size"] ** 2 * cfg["in_chans"])
    assert mask.shape == (2, cfg["num_patches"])
    assert loss.shape == ()
    assert bool(jnp.isfinite(loss))
    print("KERNEL_OK")
</pallas_src>

<mosaic_0001>
module attributes {stable_mosaic.version = 11 : i64} {
  func.func @k(%arg0: i32, %arg1: memref<8x128xf32, #tpu.memory_space<vmem>>, %arg2: memref<8x128xf32, #tpu.memory_space<vmem>>) attributes {dimension_semantics = [#tpu.dimension_semantics<arbitrary>], iteration_bounds = array<i64: 1>, scalar_prefetch = 0 : i64, scratch_operands = 0 : i64, tpu.core_type = #tpu.core_type<tc>, window_params = [{pipeline_mode = #tpu.pipeline_mode<synchronous>, transform_indices = @transform_0, window_bounds = array<i64: 8, 128>}, {pipeline_mode = #tpu.pipeline_mode<synchronous>, transform_indices = @transform_1, window_bounds = array<i64: 8, 128>}]} {
    %c0 = arith.constant 0 : index
    %c0_0 = arith.constant 0 : index
    %0 = vector.load %arg1[%c0, %c0_0] : memref<8x128xf32, #tpu.memory_space<vmem>>, vector<8x128xf32>
    %cst = arith.constant 1.000000e+00 : f32
    %1 = vector.broadcast %cst : f32 to vector<8x128xf32>
    %2 = arith.addf %0, %1 : vector<8x128xf32>
    %c0_1 = arith.constant 0 : index
    %c0_2 = arith.constant 0 : index
    %3 = vector.load %arg2[%c0_1, %c0_2] : memref<8x128xf32, #tpu.memory_space<vmem>>, vector<8x128xf32>
    tpu.vector_store %arg2[%c0_1, %c0_2], %2 {strides = array<i32>} : memref<8x128xf32, #tpu.memory_space<vmem>>, vector<8x128xf32>,
    return
  }
  func.func @transform_0(%arg0: i32) -> (i32, i32) {
    %c0_i32 = arith.constant 0 : i32
    %c0_i32_0 = arith.constant 0 : i32
    %c0_i32_1 = arith.constant 0 : i32
    return %c0_i32, %c0_i32_0 : i32, i32
  }
  func.func @transform_1(%arg0: i32) -> (i32, i32) {
    %c0_i32 = arith.constant 0 : i32
    %c0_i32_0 = arith.constant 0 : i32
    %c0_i32_1 = arith.constant 0 : i32
    return %c0_i32, %c0_i32_0 : i32, i32
  }
}

module attributes {stable_mosaic.version = 11 : i64} {
  func.func @_linear_kernel(%arg0: i32, %arg1: memref<32x48xf32, #tpu.memory_space<vmem>>, %arg2: memref<48x32xbf16, #tpu.memory_space<vmem>>, %arg3: memref<1x32xf32, #tpu.memory_space<vmem>>, %arg4: memref<32x32xf32, #tpu.memory_space<vmem>>) attributes {dimension_semantics = [#tpu.dimension_semantics<parallel>], iteration_bounds = array<i64: 1>, scalar_prefetch = 0 : i64, scratch_operands = 0 : i64, tpu.core_type = #tpu.core_type<tc>, window_params = [{transform_indices = @transform_0, window_bounds = array<i64: 32, 48>}, {pipeline_mode = #tpu.pipeline_mode<synchronous>, transform_indices = @transform_1, window_bounds = array<i64: 48, 32>}, {pipeline_mode = #tpu.pipeline_mode<synchronous>, transform_indices = @transform_2, window_bounds = array<i64: 1, 32>}, {transform_indices = @transform_3, window_bounds = array<i64: 32, 32>}]} {
    %c0 = arith.constant 0 : index
    %c0_0 = arith.constant 0 : index
    %0 = vector.load %arg1[%c0, %c0_0] : memref<32x48xf32, #tpu.memory_space<vmem>>, vector<32x48xf32>
    %1 = arith.truncf %0 : vector<32x48xf32> to vector<32x48xbf16>
    %c0_1 = arith.constant 0 : index
    %c0_2 = arith.constant 0 : index
    %2 = vector.load %arg2[%c0_1, %c0_2] : memref<48x32xbf16, #tpu.memory_space<vmem>>, vector<48x32xbf16>
    %cst = arith.constant dense<0.000000e+00> : vector<32x32xf32>
    %3 = tpu.matmul %1, %2, %cst {dimension_numbers = #tpu.dot_dimension_numbers<[1], [0], [0], [1], [0, 0, 1, 1], [], []>} : vector<32x48xbf16>, vector<48x32xbf16>, vector<32x32xf32> -> vector<32x32xf32>
    %c0_3 = arith.constant 0 : index
    %c0_4 = arith.constant 0 : index
    %4 = vector.load %arg3[%c0_3, %c0_4] : memref<1x32xf32, #tpu.memory_space<vmem>>, vector<1x32xf32>
    %5 = vector.broadcast %4 : vector<1x32xf32> to vector<32x32xf32>
    %6 = arith.addf %3, %5 : vector<32x32xf32>
    %c0_5 = arith.constant 0 : index
    %c0_6 = arith.constant 0 : index
    %7 = vector.load %arg4[%c0_5, %c0_6] : memref<32x32xf32, #tpu.memory_space<vmem>>, vector<32x32xf32>
    tpu.vector_store %arg4[%c0_5, %c0_6], %6 {strides = array<i32>} : memref<32x32xf32, #tpu.memory_space<vmem>>, vector<32x32xf32>,
    return
  }
  func.func @transform_0(%arg0: i32) -> (i32, i32) {
    %c0_i32 = arith.constant 0 : i32
    %c0_i32_0 = arith.constant 0 : i32
    return %arg0, %c0_i32 : i32, i32
  }
  func.func @transform_1(%arg0: i32) -> (i32, i32) {
    %c0_i32 = arith.constant 0 : i32
    %c0_i32_0 = arith.constant 0 : i32
    %c0_i32_1 = arith.constant 0 : i32
    return %c0_i32, %c0_i32_0 : i32, i32
  }
  func.func @transform_2(%arg0: i32) -> (i32, i32) {
    %c0_i32 = arith.constant 0 : i32
    %c0_i32_0 = arith.constant 0 : i32
    %c0_i32_1 = arith.constant 0 : i32
    return %c0_i32, %c0_i32_0 : i32, i32
  }
  func.func @transform_3(%arg0: i32) -> (i32, i32) {
    %c0_i32 = arith.constant 0 : i32
    %c0_i32_0 = arith.constant 0 : i32
    return %arg0, %c0_i32 : i32, i32
  }
}

</mosaic_0001>

<llo_original>
// kernel: tpu_custom_call.1
$region0: #{tpu_custom_call.1}
  #allocation0 [shape = 'u32[]', space=smem, size = 0x4, offset = 0x4, fixed_abs, tag = 'smem constant byte address 0x4 - core index']
  #allocation1 [shape = 'u32[144,128]{1,0:T(1,128)}', space=vmem, size = 0x12000, scoped, tag = 'internal scratch']
  %s0 = inlined_call_operand.hbm [shape: f32[8,128], index: 0, kind: input, shape index: {}]
  %s1 = inlined_call_operand.hbm [shape: f32[8,128], index: 1, kind: output, shape index: {}]
  %s2 = sld [smem:[#allocation0]]
  $region18: #{tpu_custom_call.1} parent=0
    _
  %s4 = ssub.s32 1, %s2
  %s5 = scalar_select 0, %s4, %s2
  $region1: #{tpu_custom_call.1} parent=0
    #allocation2 [shape = 'u8[4096]{0}', space=vmem, size = 0x1000, scoped, tag = 'input window, operand 0, single buffered']
    #allocation3 [shape = 's32[1]{0}', space=sflag, size = 0x4, scoped, tag = 'scoped memory for tpu_custom_call.1']
    #allocation4 [shape = 's32[1]{0}', space=sflag, size = 0x4, scoped, tag = 'scoped memory for tpu_custom_call.1']
    #allocation5 [shape = 'u8[4096]{0}', space=vmem, size = 0x1000, scoped, tag = 'output window, operand 0, single buffered']
    %6 = vsyncpa [#allocation3], 0
    %7 = vsyncpa [#allocation4], 0
    // Predicated region
    $region2: #{tpu_custom_call.1} parent=1 // pred_check
      _
    $region3: #{tpu_custom_call.1} parent=1 // pred_check_branch
      %9 = sbr.rel (0) target = $region5
    $region4: #{tpu_custom_call.1} parent=1 // pred_region
      %s11 = ssub.s32 128, 128
      %12 = vsyncadd [#allocation3], %s11
      %s14 = sshll.u32 [#allocation2], 4
      %s15 = int_to_ptr.vmem [resolvable:$true] %s14
      %17 = dma.hbm_to_vmem [thread:$0]  %s0, 128, %s15, [#allocation3]
    $region5: #{tpu_custom_call.1} parent=1 // pred_fallthru
      _
    // Predicated region
    $region6: #{tpu_custom_call.1} parent=1 // pred_check
      _
    $region7: #{tpu_custom_call.1} parent=1 // pred_check_branch
      %19 = sbr.rel (0) target = $region9
    $region8: #{tpu_custom_call.1} parent=1 // pred_region
      %20 = dma.done [#allocation3], 128
    $region9: #{tpu_custom_call.1} parent=1 // pred_fallthru
      _
    %v21 = vld [vmem:[#allocation2] sm:$0xff]
    %v22 = vadd.f32 %v21, 1.0
    %23 = vst [vmem:[#allocation5] sm:$0xff] %v22
    // Predicated region
    $region10: #{tpu_custom_call.1} parent=1 // pred_check
      _
    $region11: #{tpu_custom_call.1} parent=1 // pred_check_branch
      %25 = sbr.rel (0) target = $region13
    $region12: #{tpu_custom_call.1} parent=1 // pred_region
      %s27 = ssub.s32 128, 128
      %28 = vsyncadd [#allocation4], %s27
      %s30 = sshll.u32 [#allocation5], 4
      %s31 = int_to_ptr.vmem [resolvable:$true] %s30
      %33 = dma.vmem_to_hbm [thread:$0]  %s31, 128, %s1, [#allocation4]
    $region13: #{tpu_custom_call.1} parent=1 // pred_fallthru
      _
    // Predicated region
    $region14: #{tpu_custom_call.1} parent=1 // pred_check
      _
    $region15: #{tpu_custom_call.1} parent=1 // pred_check_branch
      %35 = sbr.rel (0) target = $region17
    $region16: #{tpu_custom_call.1} parent=1 // pred_region
      %36 = dma.done [#allocation4], 128
    $region17: #{tpu_custom_call.1} parent=1 // pred_fallthru
      _
    %37 = vsyncpa [#allocation3], 1
    %38 = vsyncpa [#allocation4], 1

// kernel: tpu_custom_call.1
$region0: #{tpu_custom_call.1}
  #allocation0 [shape = 'u32[]', space=smem, size = 0x4, offset = 0x4, fixed_abs, tag = 'smem constant byte address 0x4 - core index']
  #allocation1 [shape = 'u32[144,128]{1,0:T(1,128)}', space=vmem, size = 0x12000, scoped, tag = 'internal scratch']
  %s0 = inlined_call_operand.vmem [shape: f32[32,48], index: 0, kind: input, shape index: {}]
  %s1 = inlined_call_operand.vmem [shape: bf16[48,32], index: 1, kind: input, shape index: {}]
  %s2 = inlined_call_operand.vmem [shape: f32[1,32], index: 2, kind: input, shape index: {}]
  %s3 = inlined_call_operand.hbm [shape: f32[32,32], index: 3, kind: output, shape index: {}]
  %s4 = sld [smem:[#allocation0]]
  $region22: #{tpu_custom_call.1} parent=0
    _
  %s6 = ssub.s32 1, %s4
  %s7 = scalar_select 0, %s6, %s4
  $region1: #{tpu_custom_call.1} parent=0
    #allocation2 [shape = 'u8[16384]{0}', space=vmem, size = 0x4000, scoped, tag = 'output window, operand 0, single buffered']
    #allocation3 [shape = 's32[1]{0}', space=sflag, size = 0x4, scoped, tag = 'scoped memory for tpu_custom_call.1']
    %8 = vsyncpa [#allocation3], 0
    // Predicated region
    $region2: #{tpu_custom_call.1} parent=1 // pred_check
      _
    $region3: #{tpu_custom_call.1} parent=1 // pred_check_branch
      %10 = sbr.rel (0) target = $region5
    $region4: #{tpu_custom_call.1} parent=1 // pred_region
      _
    $region5: #{tpu_custom_call.1} parent=1 // pred_fallthru
      _
    // Predicated region
    $region6: #{tpu_custom_call.1} parent=1 // pred_check
      _
    $region7: #{tpu_custom_call.1} parent=1 // pred_check_branch
      %12 = sbr.rel (0) target = $region9
    $region8: #{tpu_custom_call.1} parent=1 // pred_region
      _
    $region9: #{tpu_custom_call.1} parent=1 // pred_fallthru
      _
    // Predicated region
    $region10: #{tpu_custom_call.1} parent=1 // pred_check
      _
    $region11: #{tpu_custom_call.1} parent=1 // pred_check_branch
      %14 = sbr.rel (0) target = $region13
    $region12: #{tpu_custom_call.1} parent=1 // pred_region
      _
    $region13: #{tpu_custom_call.1} parent=1 // pred_fallthru
      _
    %v16 = vld [vmem:[%s0] sm:$0xff]
    %v17 = vld [vmem:[%s0 + $0x8] sm:$0xff]
    %v18 = vld [vmem:[%s0 + $0x10] sm:$0xff]
    %v19 = vld [vmem:[%s0 + $0x18] sm:$0xff]
    %v20 = vpack.c.bf16 %v17, %v16
    %v21 = vpack.c.bf16 %v19, %v18
    %v22 = vld [vmem:[%s1] sm:$0xf]
    %v23 = vld [vmem:[%s1 + $0x4] sm:$0xf]
    %v24 = vld [vmem:[%s1 + $0x8] sm:$0xf]
    %v25 = vld [vmem:[%s1 + $0xc] sm:$0xf]
    %v26 = vld [vmem:[%s1 + $0x10] sm:$0xf]
    %v27 = vld [vmem:[%s1 + $0x14] sm:$0xf]
    %v28 = vld [vmem:[%s2] sm:$0x1]
    %v30 = vlaneseq
    %v31 = vshrl.u32 %v30, 7
    %v32 = vsub.s32 0, %v31
    %v33 = vrot.slane %v28, %v32
    %v41 = vunpack.c.l.b16 %v22
    %v42 = vunpack.c.l.b16 %v23
    %v43 = vunpack.c.l.b16 %v24
    %v44 = vunpack.c.l.b16 %v25
    %v45 = vunpack.c.l.b16 %v26
    %v46 = vunpack.c.l.b16 %v27
    %v47 = vpack.c.b16 %v42, %v41
    %v48 = vpack.c.b16 %v44, %v43
    %v49 = vpack.c.b16 %v46, %v45
    %vm53 = vcmask 392192
    %v55 = vsel %vm53, %v20, 0
    %v58 = vsel %vm53, %v21, 0
    %60 = vmatprep.subr.bf16.mxu0 0
    %61 = vmatpush1.bf16.msra.mxu0 0
    %62 = vmatprep.subr.bf16.mxu0 0
    %63 = vmatpush1.bf16.msra.mxu0 0
    %64 = vmatprep.subr.bf16.mxu0 0
    %65 = vmatpush1.bf16.msra.mxu0 0
    %66 = vmatprep.subr.bf16.mxu0 0
    %67 = vmatpush1.bf16.msra.mxu0 0
    %68 = vmatprep.subr.bf16.mxu0 0
    %69 = vmatpush1.bf16.msra.mxu0 0
    %70 = vmatprep.subr.bf16.mxu0 0
    %71 = vmatpush1.bf16.msra.mxu0 %v49
    %72 = vmatprep.subr.bf16.mxu0 0
    %73 = vmatpush1.bf16.msra.mxu0 %v48
    %74 = vmatprep.subr.bf16.mxu0 0
    %75 = vmatpush1.bf16.msra.mxu0 %v47
    %76 = vmatprep.subr.bf16.mxu0 0
    %77 = vmatpush2.bf16.msra.mxu0 0
    %78 = vmatprep.subr.bf16.mxu0 0
    %79 = vmatpush2.bf16.msra.mxu0 0
    %80 = vmatprep.subr.bf16.mxu0 0
    %81 = vmatpush2.bf16.msra.mxu0 0
    %82 = vmatprep.subr.bf16.mxu0 0
    %83 = vmatpush2.bf16.msra.mxu0 0
    %84 = vmatprep.subr.bf16.mxu0 0
    %85 = vmatpush2.bf16.msra.mxu0 0
    %86 = vmatprep.subr.bf16.mxu0 0
    %87 = vmatpush2.bf16.msra.mxu0 0
    %88 = vmatprep.subr.bf16.mxu0 0
    %89 = vmatpush2.bf16.msra.mxu0 0
    %90 = vmatprep.subr.bf16.mxu0 0
    %91 = vmatpush2.bf16.msra.mxu0 0
    %92 = vmatprep.mubr.bf16.mxu0 0
    %93 = vmatmul.mubr.bf16.gmra.mxu0 %v55
    %v94 = vpop.f32.mrf.mxu0
    %v95 = vadd.f32 %v33, %v94
    %v96 = vpop.f32.mrf.mxu0
    %v97 = vpop.f32.mrf.mxu0
    %v98 = vadd.f32 %v33, %v97
    %v99 = vpop.f32.mrf.mxu0
    %100 = vmatprep.mubr.bf16.mxu0 0
    %101 = vmatmul.mubr.bf16.gmra.mxu0 %v58
    %v102 = vpop.f32.mrf.mxu0
    %v103 = vadd.f32 %v33, %v102
    %v104 = vpop.f32.mrf.mxu0
    %v105 = vpop.f32.mrf.mxu0
    %v106 = vadd.f32 %v33, %v105
    %v107 = vpop.f32.mrf.mxu0
    %108 = vdwg.mxu0
    %vm109 = vcmask 261120
    %110 = vst.msk [vmem:[#allocation2] sm:$0xff] %vm109, %v95
    %111 = vst.msk [vmem:[#allocation2 + $0x8] sm:$0xff] %vm109, %v98
    %112 = vst.msk [vmem:[#allocation2 + $0x10] sm:$0xff] %vm109, %v103
    %113 = vst.msk [vmem:[#allocation2 + $0x18] sm:$0xff] %vm109, %v106
    // Predicated region
    $region14: #{tpu_custom_call.1} parent=1 // pred_check
      _
    $region15: #{tpu_custom_call.1} parent=1 // pred_check_branch
      %115 = sbr.rel (0) target = $region17
    $region16: #{tpu_custom_call.1} parent=1 // pred_region
      %s117 = ssub.s32 512, 512
      %118 = vsyncadd [#allocation3], %s117
      %s119 = sshll.u32 [#allocation2], 4
      %s120 = int_to_ptr.vmem [resolvable:$true] %s119
      %125 = dma.vmem_to_hbm [thread:$0]  %s120, 512, %s3, [#allocation3], 128, 128, 8
    $region17: #{tpu_custom_call.1} parent=1 // pred_fallthru
      _
    // Predicated region
    $region18: #{tpu_custom_call.1} parent=1 // pred_check
      _
    $region19: #{tpu_custom_call.1} parent=1 // pred_check_branch
      %127 = sbr.rel (0) target = $region21
    $region20: #{tpu_custom_call.1} parent=1 // pred_region
      %128 = dma.done [#allocation3], 512
    $region21: #{tpu_custom_call.1} parent=1 // pred_fallthru
      _
    %129 = vsyncpa [#allocation3], 1

</llo_original>
